<compile_context>
chip_gen: v7x
topology: tpu7x:2x2x1
jax: 0.10.0
libtpu: 0.0.40
codegen_flags: <defaults>
</compile_context>

<pallas_src>
import jax
import jax.numpy as jnp
from jax.experimental import pallas as pl
from jax.experimental.pallas import tpu as pltpu


def _round_up(n, m):
    return ((n + m - 1) // m) * m


def _mlp_kernel(x_ref, w1_ref, b1_ref, w2_ref, b2_ref, o_ref):
    # x_ref : (tm, hidden)   f32   (streamed straight from HBM, cast in VMEM)
    # w1_ref: (hidden, mid)  bf16  (resident)    b1_ref: (1, mid)  f32
    # w2_ref: (mid, tag)     bf16  (resident)    b2_ref: (1, tag)  f32
    # o_ref : (tm, tag)      f32
    x = x_ref[...].astype(w1_ref.dtype)           # cast right before the MXU
    h = jnp.dot(x, w1_ref[...], preferred_element_type=jnp.float32)
    h = jnp.maximum(h + b1_ref[...], 0.0)         # bias + ReLU in f32 (VPU)
    # TODO(synk): nn.Dropout is identity in eval mode; training-mode random
    # masking (pltpu.prng_seed + prng_random_bits) is intentionally not applied.
    out = jnp.dot(h.astype(w2_ref.dtype), w2_ref[...],
                  preferred_element_type=jnp.float32)
    o_ref[...] = (out + b2_ref[...]).astype(o_ref.dtype)


def multi_nonlinear_classifier(x, w1, b1, w2, b2, *, tm=512,
                               mxu_dtype=jnp.bfloat16,
                               xla_fallback_max_elems=0):
    """Fused Linear -> ReLU -> (Dropout: identity) -> Linear.

    x : (batch, seq, hidden) float32
    w1: (hidden, hidden//2)   -- transposed vs. torch nn.Linear.weight
    b1: (hidden//2,)
    w2: (hidden//2, tag_size) -- transposed vs. torch nn.Linear.weight
    b2: (tag_size,)
    mxu_dtype: dtype used on the MXU for both matmuls (bf16 by default; pass
               jnp.float32 if bit-level parity with an f32 reference matters).
    xla_fallback_max_elems: if > 0 and M*hidden is at or below it, skip the
               kernel and let XLA fuse the tiny MLP (launch overhead dominates
               at vreg-scale problems).  Disabled (0) by default.
    Returns (batch, seq, tag_size) float32.
    """
    batch, seq, hidden = x.shape
    mid = w1.shape[1]
    tag = w2.shape[1]
    M = batch * seq
    x2d = x.reshape(M, hidden)

    # Tiny-problem fallback: one vreg-scale matmul is cheaper under plain XLA.
    if xla_fallback_max_elems and M * hidden <= xla_fallback_max_elems:
        h = jnp.maximum(x2d @ w1 + b1[None, :], 0.0)
        return (h @ w2 + b2[None, :]).reshape(batch, seq, tag)

    # Row tile: big contiguous x DMAs, but make sure there are >= 2 balanced
    # 8-aligned grid steps when possible so v7x megacore can split the axis.
    if M < 2 * tm:
        tm = max(8, _round_up(pl.cdiv(M, 2), 8))
    tm = min(tm, _round_up(M, 8))
    grid_m = pl.cdiv(M, tm)            # ragged grid; Pallas masks the last tile

    # Weights to the MXU dtype (tiny, one-time, VMEM-resident); biases in f32.
    w1_c = w1.astype(mxu_dtype)
    w2_c = w2.astype(mxu_dtype)
    b1_2d = b1.reshape(1, mid).astype(jnp.float32)
    b2_2d = b2.reshape(1, tag).astype(jnp.float32)

    # Explicit VMEM budget: 2x x-tile + 2x out-tile (double-buffered streams)
    # + single-buffered resident weights/biases, with ~2x headroom.
    w_bytes = jnp.dtype(mxu_dtype).itemsize
    budget = (2 * tm * hidden * 4
              + 2 * tm * tag * 4
              + (hidden * mid + mid * tag) * w_bytes
              + (mid + tag) * 4)
    vmem_limit = int(min(64 * 1024 * 1024, max(2 * budget, 16 * 1024 * 1024)))

    out2d = pl.pallas_call(
        _mlp_kernel,
        out_shape=jax.ShapeDtypeStruct((M, tag), jnp.float32),
        grid_spec=pltpu.PrefetchScalarGridSpec(
            num_scalar_prefetch=0,
            grid=(grid_m,),
            in_specs=[
                # x row tiles: streamed f32, default double buffering.
                pl.BlockSpec((tm, hidden), lambda i: (i, 0)),
                # Weights / biases: constant index_map -> fetched once,
                # single-buffered so their VMEM footprint is not doubled.
                pl.BlockSpec((hidden, mid), lambda i: (0, 0),
                             pipeline_mode=pl.Buffered(1)),
                pl.BlockSpec((1, mid), lambda i: (0, 0),
                             pipeline_mode=pl.Buffered(1)),
                pl.BlockSpec((mid, tag), lambda i: (0, 0),
                             pipeline_mode=pl.Buffered(1)),
                pl.BlockSpec((1, tag), lambda i: (0, 0),
                             pipeline_mode=pl.Buffered(1)),
            ],
            out_specs=pl.BlockSpec((tm, tag), lambda i: (i, 0)),
        ),
        compiler_params=pltpu.CompilerParams(
            # Row-tile axis is embarrassingly parallel -> megacore split on v7x.
            dimension_semantics=("parallel",),
            vmem_limit_bytes=vmem_limit,
        ),
    )(x2d, w1_c, b1_2d, w2_c, b2_2d)

    return out2d.reshape(batch, seq, tag)


def _init_linear(key, fan_in, fan_out):
    """Deterministic init mimicking nn.Linear (uniform +-1/sqrt(fan_in)).

    Returns weight of shape (fan_in, fan_out) (transposed vs PyTorch) and bias
    of shape (fan_out,).
    """
    kw, kb = jax.random.split(key)
    bound = 1.0 / jnp.sqrt(jnp.float32(fan_in))
    w = jax.random.uniform(kw, (fan_in, fan_out), jnp.float32, -bound, bound)
    b = jax.random.uniform(kb, (fan_out,), jnp.float32, -bound, bound)
    return w, b


if __name__ == "__main__":
    # Module hyperparameters (small, consistent with the forward pass).
    hidden_size = 32
    tag_size = 8
    dropout_rate = 0.1  # identity at inference
    mid_size = hidden_size // 2

    batch, seq = 2, 8

    key = jax.random.PRNGKey(0)
    k_x, k_l1, k_l2 = jax.random.split(key, 3)

    x = jax.random.normal(k_x, (batch, seq, hidden_size), jnp.float32)
    w1, b1 = _init_linear(k_l1, hidden_size, mid_size)   # linear
    w2, b2 = _init_linear(k_l2, mid_size, tag_size)      # hidden2tag

    # xla_fallback_max_elems left at 0 so the demo exercises the kernel path.
    out = multi_nonlinear_classifier(x, w1, b1, w2, b2)
    out = jax.block_until_ready(out)

    # Pure-JAX reference with matching bf16 rounding of x / h / weights,
    # f32 accumulation and f32 bias/ReLU.
    xb = x.reshape(-1, hidden_size).astype(jnp.bfloat16).astype(jnp.float32)
    w1b = w1.astype(jnp.bfloat16).astype(jnp.float32)
    w2b = w2.astype(jnp.bfloat16).astype(jnp.float32)
    h = jnp.maximum(xb @ w1b + b1, 0.0)
    ref = h.astype(jnp.bfloat16).astype(jnp.float32) @ w2b + b2
    ref = ref.reshape(batch, seq, tag_size)

    assert out.shape == (batch, seq, tag_size)
    max_err = float(jnp.max(jnp.abs(out - ref)))
    assert jnp.allclose(out, ref, atol=2e-3, rtol=2e-3), max_err

    print("KERNEL_OK")
</pallas_src>

<mosaic_0001>
module attributes {stable_mosaic.version = 11 : i64} {
  func.func @_mlp_kernel(%arg0: i32, %arg1: memref<8x32xf32, #tpu.memory_space<vmem>>, %arg2: memref<32x16xbf16, #tpu.memory_space<vmem>>, %arg3: memref<1x16xf32, #tpu.memory_space<vmem>>, %arg4: memref<16x8xbf16, #tpu.memory_space<vmem>>, %arg5: memref<1x8xf32, #tpu.memory_space<vmem>>, %arg6: memref<8x8xf32, #tpu.memory_space<vmem>>) attributes {dimension_semantics = [#tpu.dimension_semantics<parallel>], iteration_bounds = array<i64: 2>, scalar_prefetch = 0 : i64, scratch_operands = 0 : i64, tpu.core_type = #tpu.core_type<tc>, window_params = [{transform_indices = @transform_0, window_bounds = array<i64: 8, 32>}, {pipeline_mode = #tpu.pipeline_mode<synchronous>, transform_indices = @transform_1, window_bounds = array<i64: 32, 16>}, {pipeline_mode = #tpu.pipeline_mode<synchronous>, transform_indices = @transform_2, window_bounds = array<i64: 1, 16>}, {pipeline_mode = #tpu.pipeline_mode<synchronous>, transform_indices = @transform_3, window_bounds = array<i64: 16, 8>}, {pipeline_mode = #tpu.pipeline_mode<synchronous>, transform_indices = @transform_4, window_bounds = array<i64: 1, 8>}, {transform_indices = @transform_5, window_bounds = array<i64: 8, 8>}]} {
    %c0 = arith.constant 0 : index
    %c0_0 = arith.constant 0 : index
    %0 = vector.load %arg1[%c0, %c0_0] : memref<8x32xf32, #tpu.memory_space<vmem>>, vector<8x32xf32>
    %1 = arith.truncf %0 : vector<8x32xf32> to vector<8x32xbf16>
    %c0_1 = arith.constant 0 : index
    %c0_2 = arith.constant 0 : index
    %2 = vector.load %arg2[%c0_1, %c0_2] : memref<32x16xbf16, #tpu.memory_space<vmem>>, vector<32x16xbf16>
    %cst = arith.constant dense<0.000000e+00> : vector<8x16xf32>
    %3 = tpu.matmul %1, %2, %cst {dimension_numbers = #tpu.dot_dimension_numbers<[1], [0], [0], [1], [0, 0, 1, 1], [], []>} : vector<8x32xbf16>, vector<32x16xbf16>, vector<8x16xf32> -> vector<8x16xf32>
    %c0_3 = arith.constant 0 : index
    %c0_4 = arith.constant 0 : index
    %4 = vector.load %arg3[%c0_3, %c0_4] : memref<1x16xf32, #tpu.memory_space<vmem>>, vector<1x16xf32>
    %5 = vector.broadcast %4 : vector<1x16xf32> to vector<8x16xf32>
    %6 = arith.addf %3, %5 : vector<8x16xf32>
    %cst_5 = arith.constant 0.000000e+00 : f32
    %7 = vector.broadcast %cst_5 : f32 to vector<8x16xf32>
    %8 = arith.maximumf %6, %7 : vector<8x16xf32>
    %9 = arith.truncf %8 : vector<8x16xf32> to vector<8x16xbf16>
    %c0_6 = arith.constant 0 : index
    %c0_7 = arith.constant 0 : index
    %10 = vector.load %arg4[%c0_6, %c0_7] : memref<16x8xbf16, #tpu.memory_space<vmem>>, vector<16x8xbf16>
    %cst_8 = arith.constant dense<0.000000e+00> : vector<8x8xf32>
    %11 = tpu.matmul %9, %10, %cst_8 {dimension_numbers = #tpu.dot_dimension_numbers<[1], [0], [0], [1], [0, 0, 1, 1], [], []>} : vector<8x16xbf16>, vector<16x8xbf16>, vector<8x8xf32> -> vector<8x8xf32>
    %c0_9 = arith.constant 0 : index
    %c0_10 = arith.constant 0 : index
    %12 = vector.load %arg5[%c0_9, %c0_10] : memref<1x8xf32, #tpu.memory_space<vmem>>, vector<1x8xf32>
    %13 = vector.broadcast %12 : vector<1x8xf32> to vector<8x8xf32>
    %14 = arith.addf %11, %13 : vector<8x8xf32>
    %c0_11 = arith.constant 0 : index
    %c0_12 = arith.constant 0 : index
    %15 = vector.load %arg6[%c0_11, %c0_12] : memref<8x8xf32, #tpu.memory_space<vmem>>, vector<8x8xf32>
    tpu.vector_store %arg6[%c0_11, %c0_12], %14 {strides = array<i32>} : memref<8x8xf32, #tpu.memory_space<vmem>>, vector<8x8xf32>,
    return
  }
  func.func @transform_0(%arg0: i32) -> (i32, i32) {
    %c0_i32 = arith.constant 0 : i32
    %c0_i32_0 = arith.constant 0 : i32
    return %arg0, %c0_i32 : i32, i32
  }
  func.func @transform_1(%arg0: i32) -> (i32, i32) {
    %c0_i32 = arith.constant 0 : i32
    %c0_i32_0 = arith.constant 0 : i32
    %c0_i32_1 = arith.constant 0 : i32
    return %c0_i32, %c0_i32_0 : i32, i32
  }
  func.func @transform_2(%arg0: i32) -> (i32, i32) {
    %c0_i32 = arith.constant 0 : i32
    %c0_i32_0 = arith.constant 0 : i32
    %c0_i32_1 = arith.constant 0 : i32
    return %c0_i32, %c0_i32_0 : i32, i32
  }
  func.func @transform_3(%arg0: i32) -> (i32, i32) {
    %c0_i32 = arith.constant 0 : i32
    %c0_i32_0 = arith.constant 0 : i32
    %c0_i32_1 = arith.constant 0 : i32
    return %c0_i32, %c0_i32_0 : i32, i32
  }
  func.func @transform_4(%arg0: i32) -> (i32, i32) {
    %c0_i32 = arith.constant 0 : i32
    %c0_i32_0 = arith.constant 0 : i32
    %c0_i32_1 = arith.constant 0 : i32
    return %c0_i32, %c0_i32_0 : i32, i32
  }
  func.func @transform_5(%arg0: i32) -> (i32, i32) {
    %c0_i32 = arith.constant 0 : i32
    %c0_i32_0 = arith.constant 0 : i32
    return %arg0, %c0_i32 : i32, i32
  }
}

</mosaic_0001>

<llo_original>
// kernel: tpu_custom_call.1
$region0: #{tpu_custom_call.1}
  #allocation0 [shape = 'u32[]', space=smem, size = 0x4, offset = 0x4, fixed_abs, tag = 'smem constant byte address 0x4 - core index']
  #allocation1 [shape = 'u32[144,128]{1,0:T(1,128)}', space=vmem, size = 0x12000, scoped, tag = 'internal scratch']
  %s0 = inlined_call_operand.vmem [shape: f32[16,32], index: 0, kind: input, shape index: {}]
  %s1 = inlined_call_operand.vmem [shape: bf16[32,16], index: 1, kind: input, shape index: {}]
  %s2 = inlined_call_operand.vmem [shape: f32[1,16], index: 2, kind: input, shape index: {}]
  %s3 = inlined_call_operand.vmem [shape: bf16[16,8], index: 3, kind: input, shape index: {}]
  %s4 = inlined_call_operand.vmem [shape: f32[1,8], index: 4, kind: input, shape index: {}]
  %s5 = inlined_call_operand.vmem [shape: f32[16,8], index: 5, kind: output, shape index: {}]
  %s6 = sld [smem:[#allocation0]]
  $region53: #{tpu_custom_call.1} parent=0
    _
  %s8 = ssub.s32 1, %s6
  %s9 = scalar_select 0, %s8, %s6
  loop: start=0, step=1, limit=4
  $region2: #{tpu_custom_call.1} parent=0 // loop_pre_header
    _
  $region3: #{tpu_custom_call.1} parent=0 // loop_header
    %s11 = sphi 0, %s15
    %p12 = scmp.ge.s32.totalorder %s11, 4
    %s21 = sphi 0, %s23
    %s24 = sphi 0, %s21
    %s25 = sphi 0, %s24
    %s41 = sphi 0, %s25
    %s45 = sphi 0, %s45
    %s47 = sphi 0, %s45
    %s48 = sphi 0, %s47
    %s62 = sphi 0, %s48
    %s66 = sphi 0, %s66
    %s68 = sphi 0, %s66
    %s69 = sphi 0, %s68
    %s83 = sphi 0, %s69
    %s87 = sphi 0, %s87
    %s89 = sphi 0, %s87
    %s90 = sphi 0, %s89
    %s104 = sphi 0, %s90
    %s108 = sphi 0, %s108
    %s110 = sphi 0, %s108
    %s111 = sphi 0, %s110
    %s125 = sphi 0, %s111
    %s131 = sphi 0, %s133
    %s134 = sphi 0, %s131
    %s135 = sphi 0, %s134
    %s151 = sphi 0, %s135
  $region4: #{tpu_custom_call.1} parent=0 // loop_header_branch
    %14 = sbr.rel (%p12) target = $region8
  $region5: #{tpu_custom_call.1} parent=0 // loop_body
    %s16 = ssub.s32 %s11, 1
    %s17 = ssub.s32 %s11, 2
    %s18 = sadd.s32 %s11, 1
    %s19 = ssub.s32 %s11, %s18
    %p20 = scmp.eq.s32.totalorder %s19, 0
    %s22 = sadd.s32 %s21, 1
    %s23 = scalar_select %p20, %s21, %s22
    %p26 = pneg %p20
    %p27 = scmp.eq.s32.totalorder %s11, 1
    %p28 = por %p26, %p27
    %p29 = scmp.ne.s32.totalorder %s21, %s24
    %p30 = scmp.eq.s32.totalorder %s11, 0
    %p31 = por %p29, %p30
    %p32 = scmp.ne.s32.totalorder %s21, %s24
    %p33 = scmp.eq.s32.totalorder %s16, 1
    %p34 = por %p32, %p33
    %p35 = scmp.ne.s32.totalorder %s24, %s25
    %p36 = scmp.eq.s32.totalorder %s16, 0
    %p37 = por %p35, %p36
    %p38 = scmp.ne.s32.totalorder %s24, %s25
    %p39 = scmp.eq.s32.totalorder %s17, 1
    %p40 = por %p38, %p39
    %p42 = scmp.ne.s32.totalorder %s25, %s41
    %p43 = scmp.eq.s32.totalorder %s17, 0
    %p44 = por %p42, %p43
    %s46 = sadd.s32 %s45, 1
    %p49 = scmp.eq.s32.totalorder %s11, 1
    %p50 = scmp.ne.s32.totalorder %s45, %s47
    %p51 = scmp.eq.s32.totalorder %s11, 0
    %p52 = por %p50, %p51
    %p53 = scmp.ne.s32.totalorder %s45, %s47
    %p54 = scmp.eq.s32.totalorder %s16, 1
    %p55 = por %p53, %p54
    %p56 = scmp.ne.s32.totalorder %s47, %s48
    %p57 = scmp.eq.s32.totalorder %s16, 0
    %p58 = por %p56, %p57
    %p59 = scmp.ne.s32.totalorder %s47, %s48
    %p60 = scmp.eq.s32.totalorder %s17, 1
    %p61 = por %p59, %p60
    %p63 = scmp.ne.s32.totalorder %s48, %s62
    %p64 = scmp.eq.s32.totalorder %s17, 0
    %p65 = por %p63, %p64
    %s67 = sadd.s32 %s66, 1
    %p70 = scmp.eq.s32.totalorder %s11, 1
    %p71 = scmp.ne.s32.totalorder %s66, %s68
    %p72 = scmp.eq.s32.totalorder %s11, 0
    %p73 = por %p71, %p72
    %p74 = scmp.ne.s32.totalorder %s66, %s68
    %p75 = scmp.eq.s32.totalorder %s16, 1
    %p76 = por %p74, %p75
    %p77 = scmp.ne.s32.totalorder %s68, %s69
    %p78 = scmp.eq.s32.totalorder %s16, 0
    %p79 = por %p77, %p78
    %p80 = scmp.ne.s32.totalorder %s68, %s69
    %p81 = scmp.eq.s32.totalorder %s17, 1
    %p82 = por %p80, %p81
    %p84 = scmp.ne.s32.totalorder %s69, %s83
    %p85 = scmp.eq.s32.totalorder %s17, 0
    %p86 = por %p84, %p85
    %s88 = sadd.s32 %s87, 1
    %p91 = scmp.eq.s32.totalorder %s11, 1
    %p92 = scmp.ne.s32.totalorder %s87, %s89
    %p93 = scmp.eq.s32.totalorder %s11, 0
    %p94 = por %p92, %p93
    %p95 = scmp.ne.s32.totalorder %s87, %s89
    %p96 = scmp.eq.s32.totalorder %s16, 1
    %p97 = por %p95, %p96
    %p98 = scmp.ne.s32.totalorder %s89, %s90
    %p99 = scmp.eq.s32.totalorder %s16, 0
    %p100 = por %p98, %p99
    %p101 = scmp.ne.s32.totalorder %s89, %s90
    %p102 = scmp.eq.s32.totalorder %s17, 1
    %p103 = por %p101, %p102
    %p105 = scmp.ne.s32.totalorder %s90, %s104
    %p106 = scmp.eq.s32.totalorder %s17, 0
    %p107 = por %p105, %p106
    %s109 = sadd.s32 %s108, 1
    %p112 = scmp.eq.s32.totalorder %s11, 1
    %p113 = scmp.ne.s32.totalorder %s108, %s110
    %p114 = scmp.eq.s32.totalorder %s11, 0
    %p115 = por %p113, %p114
    %p116 = scmp.ne.s32.totalorder %s108, %s110
    %p117 = scmp.eq.s32.totalorder %s16, 1
    %p118 = por %p116, %p117
    %p119 = scmp.ne.s32.totalorder %s110, %s111
    %p120 = scmp.eq.s32.totalorder %s16, 0
    %p121 = por %p119, %p120
    %p122 = scmp.ne.s32.totalorder %s110, %s111
    %p123 = scmp.eq.s32.totalorder %s17, 1
    %p124 = por %p122, %p123
    %p126 = scmp.ne.s32.totalorder %s111, %s125
    %p127 = scmp.eq.s32.totalorder %s17, 0
    %p128 = por %p126, %p127
    %s129 = ssub.s32 %s11, %s18
    %p130 = scmp.eq.s32.totalorder %s129, 0
    %s132 = sadd.s32 %s131, 1
    %s133 = scalar_select %p130, %s131, %s132
    %p136 = pneg %p130
    %p137 = scmp.eq.s32.totalorder %s11, 1
    %p138 = por %p136, %p137
    %p139 = scmp.ne.s32.totalorder %s131, %s134
    %p140 = scmp.eq.s32.totalorder %s11, 0
    %p141 = por %p139, %p140
    %p142 = scmp.ne.s32.totalorder %s131, %s134
    %p143 = scmp.eq.s32.totalorder %s16, 1
    %p144 = por %p142, %p143
    %p145 = scmp.ne.s32.totalorder %s134, %s135
    %p146 = scmp.eq.s32.totalorder %s16, 0
    %p147 = por %p145, %p146
    %p148 = scmp.ne.s32.totalorder %s134, %s135
    %p149 = scmp.eq.s32.totalorder %s17, 1
    %p150 = por %p148, %p149
    %p152 = scmp.ne.s32.totalorder %s135, %s151
    %p153 = scmp.eq.s32.totalorder %s17, 0
    %p154 = por %p152, %p153
    %p155 = scmp.le.s32.totalorder 1, %s11
    %p156 = scmp.lt.s32.totalorder %s11, 3
    %p157 = pnand %p155, %p156
    %p158 = pneg %p157
    // Predicated region
    $region9: #{tpu_custom_call.1} parent=5 // pred_check
      _
    $region10: #{tpu_custom_call.1} parent=5 // pred_check_branch
      %160 = sbr.rel (%p157) target = $region12
    $region11: #{tpu_custom_call.1} parent=5 // pred_region
      %s161 = ssub.s32 %s11, 1
      // Predicated region
      $region13: #{tpu_custom_call.1} parent=11 // pred_check
        %p162 = pneg %p58
      $region14: #{tpu_custom_call.1} parent=11 // pred_check_branch
        %164 = sbr.rel (%p162) target = $region16
      $region15: #{tpu_custom_call.1} parent=11 // pred_region
        _
      $region16: #{tpu_custom_call.1} parent=11 // pred_fallthru
        _
      // Predicated region
      $region17: #{tpu_custom_call.1} parent=11 // pred_check
        %p165 = pneg %p79
      $region18: #{tpu_custom_call.1} parent=11 // pred_check_branch
        %167 = sbr.rel (%p165) target = $region20
      $region19: #{tpu_custom_call.1} parent=11 // pred_region
        _
      $region20: #{tpu_custom_call.1} parent=11 // pred_fallthru
        _
      // Predicated region
      $region21: #{tpu_custom_call.1} parent=11 // pred_check
        %p168 = pneg %p100
      $region22: #{tpu_custom_call.1} parent=11 // pred_check_branch
        %170 = sbr.rel (%p168) target = $region24
      $region23: #{tpu_custom_call.1} parent=11 // pred_region
        _
      $region24: #{tpu_custom_call.1} parent=11 // pred_fallthru
        _
      // Predicated region
      $region25: #{tpu_custom_call.1} parent=11 // pred_check
        %p171 = pneg %p121
      $region26: #{tpu_custom_call.1} parent=11 // pred_check_branch
        %173 = sbr.rel (%p171) target = $region28
      $region27: #{tpu_custom_call.1} parent=11 // pred_region
        _
      $region28: #{tpu_custom_call.1} parent=11 // pred_fallthru
        _
    $region12: #{tpu_custom_call.1} parent=5 // pred_fallthru
      _
    %p174 = scmp.lt.s32.totalorder %s11, 2
    // Predicated region
    $region29: #{tpu_custom_call.1} parent=5 // pred_check
      %p175 = pneg %p174
    $region30: #{tpu_custom_call.1} parent=5 // pred_check_branch
      %177 = sbr.rel (%p175) target = $region32
    $region31: #{tpu_custom_call.1} parent=5 // pred_region
      // Predicated region
      $region33: #{tpu_custom_call.1} parent=31 // pred_check
        %p178 = pneg %p31
      $region34: #{tpu_custom_call.1} parent=31 // pred_check_branch
        %180 = sbr.rel (%p178) target = $region36
      $region35: #{tpu_custom_call.1} parent=31 // pred_region
        %p181 = scmp.lt.s32.totalorder %s11, 1
        %s182 = scalar_select %p181, %s11, 1
        %s183 = smul.addr %s182, 8
        %s184 = scalar_lea.vmem %s0, %s183
      $region36: #{tpu_custom_call.1} parent=31 // pred_fallthru
        _
    $region32: #{tpu_custom_call.1} parent=5 // pred_fallthru
      _
    %p185 = scmp.le.s32.totalorder 1, %s11
    %p186 = scmp.lt.s32.totalorder %s11, 3
    %p187 = pnand %p185, %p186
    %p188 = pneg %p187
    // Predicated region
    $region37: #{tpu_custom_call.1} parent=5 // pred_check
      _
    $region38: #{tpu_custom_call.1} parent=5 // pred_check_branch
      %190 = sbr.rel (%p187) target = $region40
    $region39: #{tpu_custom_call.1} parent=5 // pred_region
      %s191 = ssub.s32 %s11, 1
      %p192 = scmp.lt.s32.totalorder %s16, 1
      %s193 = scalar_select %p192, %s16, 1
      %s194 = smul.addr %s193, 8
      %s195 = scalar_lea.vmem %s0, %s194
      %p196 = pneg %p37
      %p197 = pneg %p34
      %p198 = pneg %p58
      %p199 = pneg %p55
      %p200 = pneg %p79
      %p201 = pneg %p76
      %p202 = pneg %p100
      %p203 = pneg %p97
      %p204 = pneg %p121
      %p205 = pneg %p118
      %p206 = pneg %p147
      %p207 = pneg %p144
      %p208 = scmp.lt.s32.totalorder %s16, 1
      %s209 = scalar_select %p208, %s16, 1
      %s210 = smul.addr %s209, 8
      %s211 = scalar_lea.vmem %s5, %s210
      %p212 = scmp.lt.s32.totalorder %s16, 1
      %s213 = scalar_select %p212, %s16, 1
      %s214 = smul.addr %s213, 8
      %s215 = scalar_lea.vmem %s0, %s214
      %p216 = scmp.lt.s32.totalorder %s16, 1
      %s217 = scalar_select %p216, %s16, 1
      %s218 = smul.addr %s217, 8
      %s219 = scalar_lea.vmem %s5, %s218
      %v221 = vld [vmem:[%s215] sm:$0xff]
      %v222 = vpack.c.bf16 %v221, %v221
      %v223 = vld [vmem:[%s1] sm:$0xf]
      %v224 = vld [vmem:[%s1 + $0x4] sm:$0xf]
      %v225 = vld [vmem:[%s1 + $0x8] sm:$0xf]
      %v226 = vld [vmem:[%s1 + $0xc] sm:$0xf]
      %v227 = vld [vmem:[%s2] sm:$0x1]
      %v229 = vlaneseq
      %v230 = vshrl.u32 %v229, 7
      %v231 = vsub.s32 0, %v230
      %v232 = vrot.slane %v227, %v231
      %v238 = vunpack.c.l.b16 %v223
      %v239 = vunpack.c.l.b16 %v224
      %v240 = vunpack.c.l.b16 %v225
      %v241 = vunpack.c.l.b16 %v226
      %v242 = vpack.c.b16 %v239, %v238
      %v243 = vpack.c.b16 %v241, %v240
      %vm246 = vcmask 261120
      %v248 = vsel %vm246, %v222, 0
      %250 = vmatprep.subr.bf16.mxu0 0
      %251 = vmatpush1.bf16.msra.mxu0 %v242
      %252 = vmatprep.subr.bf16.mxu0 0
      %253 = vmatpush1.bf16.msra.mxu0 %v243
      %254 = vmatprep.subr.bf16.mxu0 0
      %255 = vmatpush1.bf16.msra.mxu0 0
      %256 = vmatprep.subr.bf16.mxu0 0
      %257 = vmatpush1.bf16.msra.mxu0 0
      %258 = vmatprep.subr.bf16.mxu0 0
      %259 = vmatpush1.bf16.msra.mxu0 0
      %260 = vmatprep.subr.bf16.mxu0 0
      %261 = vmatpush1.bf16.msra.mxu0 0
      %262 = vmatprep.subr.bf16.mxu0 0
      %263 = vmatpush1.bf16.msra.mxu0 0
      %264 = vmatprep.subr.bf16.mxu0 0
      %265 = vmatpush1.bf16.msra.mxu0 0
      %266 = vmatprep.subr.bf16.mxu0 0
      %267 = vmatpush1.bf16.msra.mxu0 0
      %268 = vmatprep.subr.bf16.mxu0 0
      %269 = vmatpush1.bf16.msra.mxu0 0
      %270 = vmatprep.subr.bf16.mxu0 0
      %271 = vmatpush1.bf16.msra.mxu0 0
      %272 = vmatprep.subr.bf16.mxu0 0
      %273 = vmatpush1.bf16.msra.mxu0 0
      %274 = vmatprep.subr.bf16.mxu0 0
      %275 = vmatpush1.bf16.msra.mxu0 0
      %276 = vmatprep.subr.bf16.mxu0 0
      %277 = vmatpush1.bf16.msra.mxu0 0
      %278 = vmatprep.subr.bf16.mxu0 0
      %279 = vmatpush1.bf16.msra.mxu0 0
      %280 = vmatprep.subr.bf16.mxu0 0
      %281 = vmatpush1.bf16.msra.mxu0 0
      %282 = vmatprep.mubr.bf16.mxu0 0
      %283 = vmatmul.mubr.bf16.gmra.mrb[0].mxu0 %v248
      %v284 = vpop.f32.mrb[0].mxu0
      %v285 = vadd.f32 %v232, %v284
      %v286 = vpop.f32.mrb[0].mxu0
      %v287 = vpop.f32.mrb[0].mxu0
      %v288 = vpop.f32.mrb[0].mxu0
      %289 = vdwg.mxu0
      %v290 = vmax.f32 %v285, 0.0
      %v291 = vpack.c.bf16 %v290, %v290
      %v292 = vld [vmem:[%s3] sm:$0xf]
      %v293 = vld [vmem:[%s3 + $0x4] sm:$0xf]
      %v294 = vld [vmem:[%s4] sm:$0x1]
      %v296 = vlaneseq
      %v297 = vshrl.u32 %v296, 7
      %v298 = vsub.s32 0, %v297
      %v299 = vrot.slane %v294, %v298
      %v303 = vunpack.c.l.b16 %v292
      %v304 = vunpack.c.l.b16 %v293
      %v305 = vpack.c.b16 %v304, %v303
      %vm307 = vcmask 130048
      %v309 = vsel %vm307, %v291, 0
      %311 = vmatprep.subr.bf16.mxu0 0
      %312 = vmatpush1.bf16.msra.mxu0 %v305
      %313 = vmatprep.subr.bf16.mxu0 0
      %314 = vmatpush1.bf16.msra.mxu0 0
      %315 = vmatprep.subr.bf16.mxu0 0
      %316 = vmatpush1.bf16.msra.mxu0 0
      %317 = vmatprep.subr.bf16.mxu0 0
      %318 = vmatpush1.bf16.msra.mxu0 0
      %319 = vmatprep.subr.bf16.mxu0 0
      %320 = vmatpush1.bf16.msra.mxu0 0
      %321 = vmatprep.subr.bf16.mxu0 0
      %322 = vmatpush1.bf16.msra.mxu0 0
      %323 = vmatprep.subr.bf16.mxu0 0
      %324 = vmatpush1.bf16.msra.mxu0 0
      %325 = vmatprep.subr.bf16.mxu0 0
      %326 = vmatpush1.bf16.msra.mxu0 0
      %327 = vmatprep.subr.bf16.mxu0 0
      %328 = vmatpush1.bf16.msra.mxu0 0
      %329 = vmatprep.subr.bf16.mxu0 0
      %330 = vmatpush1.bf16.msra.mxu0 0
      %331 = vmatprep.subr.bf16.mxu0 0
      %332 = vmatpush1.bf16.msra.mxu0 0
      %333 = vmatprep.subr.bf16.mxu0 0
      %334 = vmatpush1.bf16.msra.mxu0 0
      %335 = vmatprep.subr.bf16.mxu0 0
      %336 = vmatpush1.bf16.msra.mxu0 0
      %337 = vmatprep.subr.bf16.mxu0 0
      %338 = vmatpush1.bf16.msra.mxu0 0
      %339 = vmatprep.subr.bf16.mxu0 0
      %340 = vmatpush1.bf16.msra.mxu0 0
      %341 = vmatprep.subr.bf16.mxu0 0
      %342 = vmatpush1.bf16.msra.mxu0 0
      %343 = vmatprep.mubr.bf16.mxu0 0
      %344 = vmatmul.mubr.bf16.gmra.mrb[0].mxu0 %v309
      %v345 = vpop.f32.mrb[0].mxu0
      %v346 = vadd.f32 %v299, %v345
      %v347 = vpop.f32.mrb[0].mxu0
      %v348 = vpop.f32.mrb[0].mxu0
      %v349 = vpop.f32.mrb[0].mxu0
      %350 = vdwg.mxu0
      %vm351 = vcmask 64512
      %352 = vst.msk [vmem:[%s219] sm:$0xff] %vm351, %v346
      %p353 = scmp.lt.s32.totalorder %s16, 1
      %s354 = scalar_select %p353, %s16, 1
      %s355 = smul.addr %s354, 8
      %s356 = scalar_lea.vmem %s5, %s355
      // Predicated region
      $region41: #{tpu_custom_call.1} parent=39 // pred_check
        %p357 = pneg %p144
      $region42: #{tpu_custom_call.1} parent=39 // pred_check_branch
        %359 = sbr.rel (%p357) target = $region44
      $region43: #{tpu_custom_call.1} parent=39 // pred_region
        _
      $region44: #{tpu_custom_call.1} parent=39 // pred_fallthru
        _
    $region40: #{tpu_custom_call.1} parent=5 // pred_fallthru
      _
    %p360 = scmp.le.s32.totalorder 2, %s11
    // Predicated region
    $region45: #{tpu_custom_call.1} parent=5 // pred_check
      %p361 = pneg %p360
    $region46: #{tpu_custom_call.1} parent=5 // pred_check_branch
      %363 = sbr.rel (%p361) target = $region48
    $region47: #{tpu_custom_call.1} parent=5 // pred_region
      %s364 = ssub.s32 %s11, 2
      // Predicated region
      $region49: #{tpu_custom_call.1} parent=47 // pred_check
        %p365 = pneg %p150
      $region50: #{tpu_custom_call.1} parent=47 // pred_check_branch
        %367 = sbr.rel (%p365) target = $region52
      $region51: #{tpu_custom_call.1} parent=47 // pred_region
        %p368 = scmp.lt.s32.totalorder %s17, 1
        %s369 = scalar_select %p368, %s17, 1
        %s370 = smul.addr %s369, 8
        %s371 = scalar_lea.vmem %s5, %s370
      $region52: #{tpu_custom_call.1} parent=47 // pred_fallthru
        _
    $region48: #{tpu_custom_call.1} parent=5 // pred_fallthru
      _
  $region6: #{tpu_custom_call.1} parent=0 // loop_footer
    %s15 = sadd.s32 1, %s11
  $region7: #{tpu_custom_call.1} parent=0 // loop_footer_branch
    %10 = sbr.rel target = $region3
  $region8: #{tpu_custom_call.1} parent=0 // loop_exit
    _

</llo_original>
